<compile_context>
chip_gen: v5e
topology: v5e:2x2
jax: 0.10.0
libtpu: 0.0.40
codegen_flags: <defaults>
</compile_context>

<pallas_src>
import functools

import jax
import jax.numpy as jnp
from jax import lax
from jax.experimental import pallas as pl
from jax.experimental.pallas import tpu as pltpu

LANES = 128
MAX_TILE_ROWS = 2048   # (2048, 128) f32 block = 1 MiB per input per buffer


def _round_up(x, m):
    return ((x + m - 1) // m) * m


def _berhu_partial_kernel(pred_ref, target_ref, out_ref, *, threshold,
                          total_rows, tile_rows, needs_row_mask):
    thr = jnp.float32(threshold)
    inv_2t = jnp.float32(0.5 / threshold)        # folded at trace time
    thr_sq = jnp.float32(threshold * threshold)  # folded at trace time

    pred = pred_ref[...].astype(jnp.float32)     # no-op if already f32
    target = target_ref[...].astype(jnp.float32)

    diff = jnp.abs(target - pred)
    loss = jnp.where(diff <= thr, diff, (diff * diff + thr_sq) * inv_2t)

    if needs_row_mask:
        # Zero out rows of the (possibly partial) last block that lie past
        # the end of the slab.  select() is safe even if the out-of-bounds
        # block region holds garbage / NaNs.
        row = (lax.broadcasted_iota(jnp.int32, loss.shape, 0)
               + pl.program_id(0) * tile_rows)
        loss = jnp.where(row < total_rows, loss, jnp.float32(0.0))

    # Pure-VPU fold down to one (8, LANES) vreg partial sum per grid step;
    # the cross-lane / cross-tile reduce happens once, outside the kernel.
    out_ref[...] = loss.reshape(tile_rows // 8, 8, LANES).sum(axis=0)


def berhu_loss(pred, target, threshold=0.2):
    """BerHu loss matching the PyTorch module's forward (returns scalar f32)."""
    assert pred.shape == target.shape
    n_elems = pred.size

    pred_flat = jnp.ravel(pred)
    target_flat = jnp.ravel(target)

    # Pad only when needed, and only to a multiple of the 128-lane width.
    # Padding pred and target with the SAME value gives diff == 0, which
    # contributes exactly 0 to the sum.
    rem = n_elems % LANES
    if rem:
        pad = LANES - rem
        pred_flat = jnp.pad(pred_flat, (0, pad))
        target_flat = jnp.pad(target_flat, (0, pad))

    rows = pred_flat.shape[0] // LANES
    pred2d = pred_flat.reshape(rows, LANES)
    target2d = target_flat.reshape(rows, LANES)

    # Big tiles for large inputs, shrink for tiny ones (keep a multiple of 32
    # sublanes so the block shape works for any packed dtype and the in-kernel
    # 8-row fold divides evenly).
    tile_rows = min(MAX_TILE_ROWS, _round_up(rows, 32))
    n_tiles = pl.cdiv(rows, tile_rows)
    needs_row_mask = (rows % tile_rows) != 0

    kernel = functools.partial(
        _berhu_partial_kernel,
        threshold=float(threshold),
        total_rows=rows,
        tile_rows=tile_rows,
        needs_row_mask=needs_row_mask,
    )

    partials = pl.pallas_call(
        kernel,
        out_shape=jax.ShapeDtypeStruct((n_tiles * 8, LANES), jnp.float32),
        grid_spec=pltpu.PrefetchScalarGridSpec(
            num_scalar_prefetch=0,
            grid=(n_tiles,),
            in_specs=[
                pl.BlockSpec((tile_rows, LANES), lambda i: (i, 0)),
                pl.BlockSpec((tile_rows, LANES), lambda i: (i, 0)),
            ],
            out_specs=pl.BlockSpec((8, LANES), lambda i: (i, 0)),
        ),
        compiler_params=pltpu.CompilerParams(
            dimension_semantics=("parallel",)),
    )(pred2d, target2d)

    total = jnp.sum(partials)   # tiny epilogue reduce in XLA
    return (total / jnp.float32(n_elems)).astype(jnp.float32)


def berhu_loss_ref(pred, target, threshold=0.2):
    diff = jnp.abs(target.astype(jnp.float32) - pred.astype(jnp.float32))
    mask = (diff <= threshold).astype(jnp.float32)
    l1 = diff * mask
    l2 = (diff * diff + threshold * threshold) / (2.0 * threshold) * (1.0 - mask)
    return jnp.mean(l1 + l2)


if __name__ == "__main__":
    key = jax.random.PRNGKey(0)
    k1, k2, k3, k4 = jax.random.split(key, 4)

    # Small NCHW depth-map-like inputs: batch=2, channels=1, spatial=16x16.
    pred = jax.random.uniform(k1, (2, 1, 16, 16), dtype=jnp.float32)
    target = jax.random.uniform(k2, (2, 1, 16, 16), dtype=jnp.float32)

    loss = jax.block_until_ready(berhu_loss(pred, target, threshold=0.2))
    ref = jax.block_until_ready(berhu_loss_ref(pred, target, threshold=0.2))
    assert jnp.allclose(loss, ref, rtol=1e-5, atol=1e-6), (loss, ref)

    # Ragged shape: exercises the lane pad + in-kernel row-mask tail path.
    pred_r = jax.random.uniform(k3, (2, 1, 17, 19), dtype=jnp.float32)
    target_r = jax.random.uniform(k4, (2, 1, 17, 19), dtype=jnp.float32)
    loss_r = jax.block_until_ready(berhu_loss(pred_r, target_r, threshold=0.2))
    ref_r = jax.block_until_ready(berhu_loss_ref(pred_r, target_r, threshold=0.2))
    assert jnp.allclose(loss_r, ref_r, rtol=1e-5, atol=1e-6), (loss_r, ref_r)

    # bf16 inputs: kernel casts to f32 inside (halves HBM traffic vs f32).
    pred_b = pred.astype(jnp.bfloat16)
    target_b = target.astype(jnp.bfloat16)
    loss_b = jax.block_until_ready(berhu_loss(pred_b, target_b, threshold=0.2))
    ref_b = jax.block_until_ready(berhu_loss_ref(pred_b, target_b, threshold=0.2))
    assert jnp.allclose(loss_b, ref_b, rtol=1e-5, atol=1e-6), (loss_b, ref_b)

    print("KERNEL_OK")
</pallas_src>

<mosaic_0001>
module attributes {stable_mosaic.version = 11 : i64} {
  func.func @_berhu_partial_kernel(%arg0: i32, %arg1: memref<32x128xf32, #tpu.memory_space<vmem>>, %arg2: memref<32x128xf32, #tpu.memory_space<vmem>>, %arg3: memref<8x128xf32, #tpu.memory_space<vmem>>) attributes {dimension_semantics = [#tpu.dimension_semantics<parallel>], iteration_bounds = array<i64: 1>, scalar_prefetch = 0 : i64, scratch_operands = 0 : i64, tpu.core_type = #tpu.core_type<tc>, window_params = [{transform_indices = @transform_0, window_bounds = array<i64: 32, 128>}, {transform_indices = @transform_1, window_bounds = array<i64: 32, 128>}, {transform_indices = @transform_2, window_bounds = array<i64: 8, 128>}]} {
    %c0 = arith.constant 0 : index
    %c0_0 = arith.constant 0 : index
    %0 = vector.load %arg1[%c0, %c0_0] : memref<32x128xf32, #tpu.memory_space<vmem>>, vector<32x128xf32>
    %c0_1 = arith.constant 0 : index
    %c0_2 = arith.constant 0 : index
    %1 = vector.load %arg2[%c0_1, %c0_2] : memref<32x128xf32, #tpu.memory_space<vmem>>, vector<32x128xf32>
    %2 = arith.subf %1, %0 : vector<32x128xf32>
    %3 = math.absf %2 : vector<32x128xf32>
    %cst = arith.constant 2.000000e-01 : f32
    %4 = vector.broadcast %cst : f32 to vector<32x128xf32>
    %5 = arith.cmpf ole, %3, %4 : vector<32x128xf32>
    %6 = arith.mulf %3, %3 : vector<32x128xf32>
    %cst_3 = arith.constant 4.000000e-02 : f32
    %7 = vector.broadcast %cst_3 : f32 to vector<32x128xf32>
    %8 = arith.addf %6, %7 : vector<32x128xf32>
    %cst_4 = arith.constant 2.500000e+00 : f32
    %9 = vector.broadcast %cst_4 : f32 to vector<32x128xf32>
    %10 = arith.mulf %8, %9 : vector<32x128xf32>
    %11 = arith.select %5, %3, %10 : vector<32x128xi1>, vector<32x128xf32>
    %12 = tpu.iota {dimensions = array<i32: 0>} : vector<32x128xi32>
    %c32_i32 = arith.constant 32 : i32
    %13 = arith.muli %arg0, %c32_i32 : i32
    %14 = vector.broadcast %13 : i32 to vector<32x128xi32>
    %15 = arith.addi %12, %14 : vector<32x128xi32>
    %c4_i32 = arith.constant 4 : i32
    %16 = vector.broadcast %c4_i32 : i32 to vector<32x128xi32>
    %17 = arith.cmpi slt, %15, %16 : vector<32x128xi32>
    %cst_5 = arith.constant 0.000000e+00 : f32
    %18 = vector.broadcast %cst_5 : f32 to vector<32x128xf32>
    %19 = arith.select %17, %11, %18 : vector<32x128xi1>, vector<32x128xf32>
    %20 = vector.shape_cast %19 : vector<32x128xf32> to vector<4x8x128xf32>
    %cst_6 = arith.constant dense<0.000000e+00> : vector<8x128xf32>
    %21 = vector.multi_reduction <add>, %20, %cst_6 [0] : vector<4x8x128xf32> to vector<8x128xf32>
    %c0_7 = arith.constant 0 : index
    %c0_8 = arith.constant 0 : index
    %22 = vector.load %arg3[%c0_7, %c0_8] : memref<8x128xf32, #tpu.memory_space<vmem>>, vector<8x128xf32>
    tpu.vector_store %arg3[%c0_7, %c0_8], %21 {strides = array<i32>} : memref<8x128xf32, #tpu.memory_space<vmem>>, vector<8x128xf32>,
    return
  }
  func.func @transform_0(%arg0: i32) -> (i32, i32) {
    %c0_i32 = arith.constant 0 : i32
    %c0_i32_0 = arith.constant 0 : i32
    return %arg0, %c0_i32 : i32, i32
  }
  func.func @transform_1(%arg0: i32) -> (i32, i32) {
    %c0_i32 = arith.constant 0 : i32
    %c0_i32_0 = arith.constant 0 : i32
    return %arg0, %c0_i32 : i32, i32
  }
  func.func @transform_2(%arg0: i32) -> (i32, i32) {
    %c0_i32 = arith.constant 0 : i32
    %c0_i32_0 = arith.constant 0 : i32
    return %arg0, %c0_i32 : i32, i32
  }
}

</mosaic_0001>

<llo_original>
// kernel: tpu_custom_call.1
$region0: #{tpu_custom_call.1}
  #allocation0 [shape = 'u32[]', space=smem, size = 0x4, offset = 0x4, fixed_abs, tag = 'smem constant byte address 0x4 - core index']
  #allocation1 [shape = 'u32[72,128]{1,0:T(1,128)}', space=vmem, size = 0x9000, scoped, tag = 'internal scratch']
  %s0 = inlined_call_operand.hbm [shape: f32[4,128], index: 0, kind: input, shape index: {}]
  %s1 = inlined_call_operand.hbm [shape: f32[4,128], index: 1, kind: input, shape index: {}]
  %s2 = inlined_call_operand.hbm [shape: f32[8,128], index: 2, kind: output, shape index: {}]
  %s3 = sld [smem:[#allocation0]]
  $region26: #{tpu_custom_call.1} parent=0
    _
  %s5 = ssub.s32 1, %s3
  %s6 = scalar_select 0, %s5, %s3
  $region1: #{tpu_custom_call.1} parent=0
    #allocation2 [shape = 'u8[16384]{0}', space=vmem, size = 0x4000, scoped, tag = 'input window, operand 0, single buffered']
    #allocation3 [shape = 's32[1]{0}', space=sflag, size = 0x4, scoped, tag = 'scoped memory for tpu_custom_call.1']
    #allocation4 [shape = 's32[1]{0}', space=sflag, size = 0x4, scoped, tag = 'scoped memory for tpu_custom_call.1']
    #allocation5 [shape = 'u8[16384]{0}', space=vmem, size = 0x4000, scoped, tag = 'input window, operand 1, single buffered']
    #allocation6 [shape = 's32[1]{0}', space=sflag, size = 0x4, scoped, tag = 'scoped memory for tpu_custom_call.1']
    #allocation7 [shape = 'u8[4096]{0}', space=vmem, size = 0x1000, scoped, tag = 'output window, operand 0, single buffered']
    %7 = vsyncpa [#allocation3], 0
    %8 = vsyncpa [#allocation6], 0
    %9 = vsyncpa [#allocation4], 0
    // Predicated region
    $region2: #{tpu_custom_call.1} parent=1 // pred_check
      _
    $region3: #{tpu_custom_call.1} parent=1 // pred_check_branch
      %11 = sbr.rel (0) target = $region5
    $region4: #{tpu_custom_call.1} parent=1 // pred_region
      %13 = vsyncadd [#allocation3], 448
      %s14 = sshll.u32 %s0, 4
      %s15 = int_to_ptr.hbm [resolvable:$true] %s14
      %s16 = sshll.u32 [#allocation2], 4
      %s17 = int_to_ptr.vmem [resolvable:$true] %s16
      %22 = dma.hbm_to_vmem [thread:$0]  %s15, 64, %s17, [#allocation3], 64, 64, 4
    $region5: #{tpu_custom_call.1} parent=1 // pred_fallthru
      _
    // Predicated region
    $region6: #{tpu_custom_call.1} parent=1 // pred_check
      _
    $region7: #{tpu_custom_call.1} parent=1 // pred_check_branch
      %24 = sbr.rel (0) target = $region9
    $region8: #{tpu_custom_call.1} parent=1 // pred_region
      %26 = vsyncadd [#allocation6], 448
      %s27 = sshll.u32 %s1, 4
      %s28 = int_to_ptr.hbm [resolvable:$true] %s27
      %s29 = sshll.u32 [#allocation5], 4
      %s30 = int_to_ptr.vmem [resolvable:$true] %s29
      %35 = dma.hbm_to_vmem [thread:$0]  %s28, 64, %s30, [#allocation6], 64, 64, 4
    $region9: #{tpu_custom_call.1} parent=1 // pred_fallthru
      _
    // Predicated region
    $region10: #{tpu_custom_call.1} parent=1 // pred_check
      _
    $region11: #{tpu_custom_call.1} parent=1 // pred_check_branch
      %37 = sbr.rel (0) target = $region13
    $region12: #{tpu_custom_call.1} parent=1 // pred_region
      %39 = dma.done [#allocation3], 512
    $region13: #{tpu_custom_call.1} parent=1 // pred_fallthru
      _
    // Predicated region
    $region14: #{tpu_custom_call.1} parent=1 // pred_check
      _
    $region15: #{tpu_custom_call.1} parent=1 // pred_check_branch
      %41 = sbr.rel (0) target = $region17
    $region16: #{tpu_custom_call.1} parent=1 // pred_region
      %43 = dma.done [#allocation6], 512
    $region17: #{tpu_custom_call.1} parent=1 // pred_fallthru
      _
    %v44 = vld [vmem:[#allocation2] sm:$0xff]
    %v45 = vld [vmem:[#allocation2 + $0x8] sm:$0xff]
    %v46 = vld [vmem:[#allocation2 + $0x10] sm:$0xff]
    %v47 = vld [vmem:[#allocation2 + $0x18] sm:$0xff]
    %v48 = vld [vmem:[#allocation5] sm:$0xff]
    %v49 = vld [vmem:[#allocation5 + $0x8] sm:$0xff]
    %v50 = vld [vmem:[#allocation5 + $0x10] sm:$0xff]
    %v51 = vld [vmem:[#allocation5 + $0x18] sm:$0xff]
    %v52 = vsub.f32 %v48, %v44
    %v53 = vsub.f32 %v49, %v45
    %v54 = vsub.f32 %v50, %v46
    %v55 = vsub.f32 %v51, %v47
    %v56 = vand.u32 2147483647, %v52
    %v57 = vand.u32 2147483647, %v53
    %v58 = vand.u32 2147483647, %v54
    %v59 = vand.u32 2147483647, %v55
    %vm60 = vcmp.le.f32.partialorder %v56, 0.2
    %vm61 = vcmp.le.f32.partialorder %v57, 0.2
    %vm62 = vcmp.le.f32.partialorder %v58, 0.2
    %vm63 = vcmp.le.f32.partialorder %v59, 0.2
    %v64 = vmul.f32 %v56, %v56
    %v65 = vmul.f32 %v57, %v57
    %v66 = vmul.f32 %v58, %v58
    %v67 = vmul.f32 %v59, %v59
    %v68 = vadd.f32 %v64, 0.04
    %v69 = vadd.f32 %v65, 0.04
    %v70 = vadd.f32 %v66, 0.04
    %v71 = vadd.f32 %v67, 0.04
    %v72 = vmul.f32 %v68, 2.5
    %v73 = vmul.f32 %v69, 2.5
    %v74 = vmul.f32 %v70, 2.5
    %v75 = vmul.f32 %v71, 2.5
    %v76 = vsel %vm60, %v56, %v72
    %v77 = vsel %vm61, %v57, %v73
    %v78 = vsel %vm62, %v58, %v74
    %v79 = vsel %vm63, %v59, %v75
    %v80 = vlaneseq
    %v81 = vshrl.u32 %v80, 7
    %v82 = vadd.s32 %v81, 8
    %v83 = vadd.s32 %v81, 16
    %v84 = vadd.s32 %v81, 24
    %s85 = smul.u32 0, 32
    %v86 = vstv %s85
    %v87 = vadd.s32 %v81, %v86
    %v88 = vadd.s32 %v82, %v86
    %v89 = vadd.s32 %v83, %v86
    %v90 = vadd.s32 %v84, %v86
    %vm91 = vcmp.lt.s32.totalorder %v87, 4
    %vm92 = vcmp.lt.s32.totalorder %v88, 4
    %vm93 = vcmp.lt.s32.totalorder %v89, 4
    %vm94 = vcmp.lt.s32.totalorder %v90, 4
    %v95 = vsel %vm91, %v76, 0.0
    %v96 = vsel %vm92, %v77, 0.0
    %v97 = vsel %vm93, %v78, 0.0
    %v98 = vsel %vm94, %v79, 0.0
    %v99 = vadd.f32 %v95, %v96
    %v100 = vadd.f32 %v99, %v97
    %v101 = vadd.f32 %v100, %v98
    %102 = vst [vmem:[#allocation7] sm:$0xff] %v101
    // Predicated region
    $region18: #{tpu_custom_call.1} parent=1 // pred_check
      _
    $region19: #{tpu_custom_call.1} parent=1 // pred_check_branch
      %104 = sbr.rel (0) target = $region21
    $region20: #{tpu_custom_call.1} parent=1 // pred_region
      %106 = vsyncadd [#allocation4], 0
      %s108 = sshll.u32 [#allocation7], 4
      %s109 = int_to_ptr.vmem [resolvable:$true] %s108
      %s110 = sshll.u32 %s2, 4
      %s111 = int_to_ptr.hbm [resolvable:$true] %s110
      %113 = dma.vmem_to_hbm [thread:$0]  %s109, 128, %s111, [#allocation4]
    $region21: #{tpu_custom_call.1} parent=1 // pred_fallthru
      _
    // Predicated region
    $region22: #{tpu_custom_call.1} parent=1 // pred_check
      _
    $region23: #{tpu_custom_call.1} parent=1 // pred_check_branch
      %115 = sbr.rel (0) target = $region25
    $region24: #{tpu_custom_call.1} parent=1 // pred_region
      %117 = dma.done [#allocation4], 128
    $region25: #{tpu_custom_call.1} parent=1 // pred_fallthru
      _
    %118 = vsyncpa [#allocation3], 1
    %119 = vsyncpa [#allocation6], 1
    %120 = vsyncpa [#allocation4], 1

</llo_original>
